<compile_context>
chip_gen: v7x
topology: tpu7x:2x2x1
jax: 0.10.0
libtpu: 0.0.40
codegen_flags: <defaults>
</compile_context>

<pallas_src>
import jax
import jax.numpy as jnp
from jax import lax
from jax.experimental import pallas as pl
from jax.experimental.pallas import tpu as pltpu


def _output_recognition_kernel(y0_ref, var_t_ref, loc_ref, cov_ref):
    # y0_ref:    (1, dy, 1)    output_sequence[b, 0, :] as a column
    # var_t_ref: (1, ds, 1)    raw (pre-softplus) variance parameter (one padded vreg)
    # loc_ref:   (1, ds, P)
    # cov_ref:   (1, ds, P*P)  flattened (P, P) diag_embed, reshaped in the wrapper
    _, ds, P = loc_ref.shape
    dy = y0_ref.shape[1]
    PP = cov_ref.shape[2]

    # --- loc: build in registers, ONE full-tile store (no masked partial overwrite) ---
    yb = jnp.broadcast_to(y0_ref[...], (1, dy, P))          # lane-broadcast over particles
    if dy < ds:
        loc = jnp.concatenate(
            [yb, jnp.zeros((1, ds - dy, P), jnp.float32)], axis=1)
    else:
        loc = yb
    loc_ref[...] = loc

    # --- variance = safe_softplus(variance_t)  (softplus + small eps), vector EUP ---
    vt = var_t_ref[...]                                      # (1, ds, 1)
    var = jnp.where(vt > 20.0, vt,
                    jnp.log1p(jnp.exp(jnp.minimum(vt, 20.0)))) + 1e-6

    # --- cov: reused flattened identity mask * variance ---
    # Flattened (P, P): k = p*P + q is on the diagonal iff k % (P+1) == 0.
    k = lax.broadcasted_iota(jnp.int32, (1, 1, PP), 2)
    eye_flat = (k % (P + 1) == 0).astype(jnp.float32)        # (1, 1, P*P), built once/step
    cov_ref[...] = var * eye_flat                            # broadcast → (1, ds, P*P)


def output_recognition_forward(output_sequence, input_sequence, variance_t,
                               *, dim_states, num_particles=1):
    """Pallas implementation of OutputRecognition.forward.

    output_sequence: (batch, seq, dim_outputs)  float32
    input_sequence:  (batch, seq, dim_inputs)   float32  (unused by the model)
    variance_t:      (dim_states,)              float32  raw parameter
    Returns (loc, covariance_matrix) of the MultivariateNormal:
      loc: (batch, dim_states, num_particles)
      cov: (batch, dim_states, num_particles, num_particles)
    """
    del input_sequence  # unpacked but unused in the PyTorch forward
    assert output_sequence.ndim == 3
    B, T, dy = output_sequence.shape
    ds, P = dim_states, num_particles
    assert dy <= ds

    # Glue: only the t=0 slice is ever read — slice it host-side (B*dy elements).
    # Never transpose / DMA the full (B, T, dy) sequence.
    y0 = output_sequence[:, 0, :, None].astype(jnp.float32)          # (B, dy, 1)
    var_t = jnp.asarray(variance_t, jnp.float32).reshape(1, ds, 1)   # one padded vreg

    cost = pl.CostEstimate(
        flops=B * ds * (P * P + P),
        transcendentals=2 * B * ds,
        bytes_accessed=4 * (B * dy + ds + B * ds * P + B * ds * P * P),
    )

    loc, cov_flat = pl.pallas_call(
        _output_recognition_kernel,
        grid=(B,),
        in_specs=[
            pl.BlockSpec((1, dy, 1), lambda b: (b, 0, 0)),
            pl.BlockSpec((1, ds, 1), lambda b: (0, 0, 0)),
        ],
        out_specs=(
            pl.BlockSpec((1, ds, P), lambda b: (b, 0, 0)),
            pl.BlockSpec((1, ds, P * P), lambda b: (b, 0, 0)),
        ),
        out_shape=(
            jax.ShapeDtypeStruct((B, ds, P), jnp.float32),
            jax.ShapeDtypeStruct((B, ds, P * P), jnp.float32),
        ),
        compiler_params=pltpu.CompilerParams(
            dimension_semantics=("parallel",)),   # v7x: shard batch across both TCs
        cost_estimate=cost,
    )(y0, var_t)

    # Contiguous (free) reshape back to the diag_embed shape.
    cov = cov_flat.reshape(B, ds, P, P)
    return loc, cov


if __name__ == "__main__":
    key = jax.random.PRNGKey(0)
    batch, seq = 4, 8
    dim_outputs, dim_inputs, dim_states = 2, 1, 4
    num_particles = 8
    variance = 0.01

    k1, k2 = jax.random.split(key)
    output_seq = jax.random.normal(k1, (batch, seq, dim_outputs), dtype=jnp.float32)
    input_seq = jax.random.normal(k2, (batch, seq, dim_inputs), dtype=jnp.float32)

    # deterministic parameter init (matches nn.Parameter init in __init__):
    # variance_t = ones(dim_states) * inverse_softplus(variance)
    inv_softplus = jnp.log(jnp.expm1(jnp.float32(variance)))
    variance_t = jnp.ones((dim_states,), jnp.float32) * inv_softplus

    loc, cov = output_recognition_forward(
        output_seq, input_seq, variance_t,
        dim_states=dim_states, num_particles=num_particles)
    jax.block_until_ready((loc, cov))

    # reference check in plain JAX
    loc_r = jnp.zeros((batch, dim_states), jnp.float32)
    loc_r = loc_r.at[:, :dim_outputs].set(output_seq[:, 0])
    loc_r = jnp.broadcast_to(loc_r[None], (num_particles, batch, dim_states)).transpose(1, 2, 0)
    var_r = jax.nn.softplus(variance_t) + 1e-6   # safe_softplus = softplus + eps
    cov_diag = jnp.broadcast_to(var_r[None, None], (num_particles, batch, dim_states)).transpose(1, 2, 0)
    cov_r = cov_diag[..., None] * jnp.eye(num_particles, dtype=jnp.float32)

    assert loc.shape == (batch, dim_states, num_particles)
    assert cov.shape == (batch, dim_states, num_particles, num_particles)
    assert jnp.allclose(loc, loc_r, atol=1e-6), "loc mismatch"
    assert jnp.allclose(cov, cov_r, atol=1e-6), "covariance mismatch"

    print("KERNEL_OK")
</pallas_src>

<mosaic_0001>
module attributes {stable_mosaic.version = 11 : i64} {
  func.func @_output_recognition_kernel(%arg0: i32, %arg1: memref<1x2x1xf32, #tpu.memory_space<vmem>>, %arg2: memref<1x4x1xf32, #tpu.memory_space<vmem>>, %arg3: memref<1x4x8xf32, #tpu.memory_space<vmem>>, %arg4: memref<1x4x64xf32, #tpu.memory_space<vmem>>) attributes {dimension_semantics = [#tpu.dimension_semantics<parallel>], iteration_bounds = array<i64: 4>, scalar_prefetch = 0 : i64, scratch_operands = 0 : i64, tpu.core_type = #tpu.core_type<tc>, window_params = [{transform_indices = @transform_0, window_bounds = array<i64: 1, 2, 1>}, {pipeline_mode = #tpu.pipeline_mode<synchronous>, transform_indices = @transform_1, window_bounds = array<i64: 1, 4, 1>}, {transform_indices = @transform_2, window_bounds = array<i64: 1, 4, 8>}, {transform_indices = @transform_3, window_bounds = array<i64: 1, 4, 64>}]} {
    %c0 = arith.constant 0 : index
    %c0_0 = arith.constant 0 : index
    %c0_1 = arith.constant 0 : index
    %0 = vector.load %arg1[%c0, %c0_0, %c0_1] : memref<1x2x1xf32, #tpu.memory_space<vmem>>, vector<1x2x1xf32>
    %1 = vector.shape_cast %0 : vector<1x2x1xf32> to vector<1x2x1xf32>
    %2 = vector.broadcast %1 : vector<1x2x1xf32> to vector<1x2x8xf32>
    %cst = arith.constant 0.000000e+00 : f32
    %3 = vector.broadcast %cst : f32 to vector<1x2x8xf32>
    %4 = tpu.concatenate %2, %3 in 1 : vector<1x2x8xf32>, vector<1x2x8xf32> -> vector<1x4x8xf32>
    %c0_2 = arith.constant 0 : index
    %c0_3 = arith.constant 0 : index
    %c0_4 = arith.constant 0 : index
    %5 = vector.load %arg3[%c0_2, %c0_3, %c0_4] : memref<1x4x8xf32, #tpu.memory_space<vmem>>, vector<1x4x8xf32>
    tpu.vector_store %arg3[%c0_2, %c0_3, %c0_4], %4 {strides = array<i32>} : memref<1x4x8xf32, #tpu.memory_space<vmem>>, vector<1x4x8xf32>,
    %c0_5 = arith.constant 0 : index
    %c0_6 = arith.constant 0 : index
    %c0_7 = arith.constant 0 : index
    %6 = vector.load %arg2[%c0_5, %c0_6, %c0_7] : memref<1x4x1xf32, #tpu.memory_space<vmem>>, vector<1x4x1xf32>
    %cst_8 = arith.constant 2.000000e+01 : f32
    %7 = vector.broadcast %cst_8 : f32 to vector<1x4x1xf32>
    %8 = arith.cmpf ogt, %6, %7 : vector<1x4x1xf32>
    %cst_9 = arith.constant 2.000000e+01 : f32
    %9 = vector.broadcast %cst_9 : f32 to vector<1x4x1xf32>
    %10 = arith.minimumf %6, %9 : vector<1x4x1xf32>
    %11 = math.exp %10 : vector<1x4x1xf32>
    %12 = math.log1p %11 : vector<1x4x1xf32>
    %13 = arith.select %8, %6, %12 : vector<1x4x1xi1>, vector<1x4x1xf32>
    %cst_10 = arith.constant 9.99999997E-7 : f32
    %14 = vector.broadcast %cst_10 : f32 to vector<1x4x1xf32>
    %15 = arith.addf %13, %14 : vector<1x4x1xf32>
    %16 = tpu.iota {dimensions = array<i32: 2>} : vector<1x1x64xi32>
    %c9_i32 = arith.constant 9 : i32
    %c0_i32 = arith.constant 0 : i32
    %17 = arith.cmpi eq, %c9_i32, %c0_i32 : i32
    %c1_i32 = arith.constant 1 : i32
    %18 = arith.select %17, %c1_i32, %c9_i32 : i32
    %19 = vector.broadcast %18 : i32 to vector<1x1x64xi32>
    %20 = arith.remsi %16, %19 : vector<1x1x64xi32>
    %c0_i32_11 = arith.constant 0 : i32
    %21 = vector.broadcast %c0_i32_11 : i32 to vector<1x1x64xi32>
    %22 = arith.cmpi ne, %20, %21 : vector<1x1x64xi32>
    %c0_i32_12 = arith.constant 0 : i32
    %23 = vector.broadcast %c0_i32_12 : i32 to vector<1x1x64xi32>
    %24 = arith.cmpi slt, %20, %23 : vector<1x1x64xi32>
    %c0_i32_13 = arith.constant 0 : i32
    %25 = arith.cmpi slt, %18, %c0_i32_13 : i32
    %26 = vector.broadcast %25 : i1 to vector<1x1x64xi1>
    %27 = vector.broadcast %26 : vector<1x1x64xi1> to vector<1x1x64xi1>
    %28 = arith.xori %24, %27 : vector<1x1x64xi1>
    %29 = arith.andi %28, %22 : vector<1x1x64xi1>
    %30 = vector.broadcast %18 : i32 to vector<1x1x64xi32>
    %31 = arith.addi %20, %30 : vector<1x1x64xi32>
    %32 = arith.select %29, %31, %20 : vector<1x1x64xi1>, vector<1x1x64xi32>
    %c0_i32_14 = arith.constant 0 : i32
    %33 = vector.broadcast %c0_i32_14 : i32 to vector<1x1x64xi32>
    %34 = arith.cmpi eq, %32, %33 : vector<1x1x64xi32>
    %35 = arith.extui %34 : vector<1x1x64xi1> to vector<1x1x64xi32>
    %36 = arith.sitofp %35 : vector<1x1x64xi32> to vector<1x1x64xf32>
    %37 = vector.broadcast %15 : vector<1x4x1xf32> to vector<1x4x64xf32>
    %38 = vector.broadcast %36 : vector<1x1x64xf32> to vector<1x4x64xf32>
    %39 = arith.mulf %37, %38 : vector<1x4x64xf32>
    %c0_15 = arith.constant 0 : index
    %c0_16 = arith.constant 0 : index
    %c0_17 = arith.constant 0 : index
    %40 = vector.load %arg4[%c0_15, %c0_16, %c0_17] : memref<1x4x64xf32, #tpu.memory_space<vmem>>, vector<1x4x64xf32>
    tpu.vector_store %arg4[%c0_15, %c0_16, %c0_17], %39 {strides = array<i32>} : memref<1x4x64xf32, #tpu.memory_space<vmem>>, vector<1x4x64xf32>,
    return
  }
  func.func @transform_0(%arg0: i32) -> (i32, i32, i32) {
    %c0_i32 = arith.constant 0 : i32
    %c0_i32_0 = arith.constant 0 : i32
    %c0_i32_1 = arith.constant 0 : i32
    return %arg0, %c0_i32, %c0_i32_0 : i32, i32, i32
  }
  func.func @transform_1(%arg0: i32) -> (i32, i32, i32) {
    %c0_i32 = arith.constant 0 : i32
    %c0_i32_0 = arith.constant 0 : i32
    %c0_i32_1 = arith.constant 0 : i32
    %c0_i32_2 = arith.constant 0 : i32
    return %c0_i32, %c0_i32_0, %c0_i32_1 : i32, i32, i32
  }
  func.func @transform_2(%arg0: i32) -> (i32, i32, i32) {
    %c0_i32 = arith.constant 0 : i32
    %c0_i32_0 = arith.constant 0 : i32
    %c0_i32_1 = arith.constant 0 : i32
    return %arg0, %c0_i32, %c0_i32_0 : i32, i32, i32
  }
  func.func @transform_3(%arg0: i32) -> (i32, i32, i32) {
    %c0_i32 = arith.constant 0 : i32
    %c0_i32_0 = arith.constant 0 : i32
    %c0_i32_1 = arith.constant 0 : i32
    return %arg0, %c0_i32, %c0_i32_0 : i32, i32, i32
  }
}

</mosaic_0001>

<llo_original>
// kernel: tpu_custom_call.1
$region0: #{tpu_custom_call.1}
  #allocation0 [shape = 'u32[]', space=smem, size = 0x4, offset = 0x4, fixed_abs, tag = 'smem constant byte address 0x4 - core index']
  #allocation1 [shape = 'u32[144,128]{1,0:T(1,128)}', space=vmem, size = 0x12000, scoped, tag = 'internal scratch']
  %s0 = inlined_call_operand.vmem [shape: f32[4,2,1], index: 0, kind: input, shape index: {}]
  %s1 = inlined_call_operand.vmem [shape: f32[1,4,1], index: 1, kind: input, shape index: {}]
  %s2 = inlined_call_operand.hbm [shape: f32[4,4,8], index: 2, kind: output, shape index: {0}]
  %s3 = inlined_call_operand.hbm [shape: f32[4,4,64], index: 3, kind: output, shape index: {1}]
  %4 = xla_tuple %s2, %s3
  %s5 = sld [smem:[#allocation0]]
  $region49: #{tpu_custom_call.1} parent=0
    _
  %s7 = ssub.s32 1, %s5
  %s8 = scalar_select 0, %s7, %s5
  $region1: #{tpu_custom_call.1} parent=0
    #allocation2 [shape = 'u8[4096]{0}', space=vmem, size = 0x1000, scoped, tag = 'output window, operand 0']
    #allocation3 [shape = 's32[2]{0}', space=sflag, size = 0x8, scoped, tag = 'scoped memory for tpu_custom_call.1']
    #allocation4 [shape = 'u8[4096]{0}', space=vmem, size = 0x1000, scoped, tag = 'output window, operand 1']
    #allocation5 [shape = 's32[2]{0}', space=sflag, size = 0x8, scoped, tag = 'scoped memory for tpu_custom_call.1']
    %9 = vsyncpa [#allocation3], 0
    %s10 = scalar_lea.sflag [#allocation3], 1
    %11 = vsyncpa %s10, 0
    %12 = vsyncpa [#allocation5], 0
    %s13 = scalar_lea.sflag [#allocation5], 1
    %14 = vsyncpa %s13, 0
    loop: start=0, step=1, limit=6
    $region2: #{tpu_custom_call.1} parent=1 // loop_pre_header
      _
    $region3: #{tpu_custom_call.1} parent=1 // loop_header
      %s16 = sphi 0, %s20
      %p17 = scmp.ge.s32.totalorder %s16, 6
      %s26 = sphi 0, %s28
      %s29 = sphi 0, %s26
      %s30 = sphi 0, %s29
      %s46 = sphi 0, %s30
      %s50 = sphi 0, %s50
      %s52 = sphi 0, %s50
      %s53 = sphi 0, %s52
      %s67 = sphi 0, %s53
      %s73 = sphi 0, %s75
      %s76 = sphi 0, %s73
      %s77 = sphi 0, %s76
      %s93 = sphi 0, %s77
      %s99 = sphi 0, %s101
      %s102 = sphi 0, %s99
      %s103 = sphi 0, %s102
      %s119 = sphi 0, %s103
    $region4: #{tpu_custom_call.1} parent=1 // loop_header_branch
      %19 = sbr.rel (%p17) target = $region8
    $region5: #{tpu_custom_call.1} parent=1 // loop_body
      %s21 = ssub.s32 %s16, 1
      %s22 = ssub.s32 %s16, 2
      %s23 = sadd.s32 %s16, 1
      %s24 = ssub.s32 %s16, %s23
      %p25 = scmp.eq.s32.totalorder %s24, 0
      %s27 = sadd.s32 %s26, 1
      %s28 = scalar_select %p25, %s26, %s27
      %p31 = pneg %p25
      %p32 = scmp.eq.s32.totalorder %s16, 3
      %p33 = por %p31, %p32
      %p34 = scmp.ne.s32.totalorder %s26, %s29
      %p35 = scmp.eq.s32.totalorder %s16, 0
      %p36 = por %p34, %p35
      %p37 = scmp.ne.s32.totalorder %s26, %s29
      %p38 = scmp.eq.s32.totalorder %s21, 3
      %p39 = por %p37, %p38
      %p40 = scmp.ne.s32.totalorder %s29, %s30
      %p41 = scmp.eq.s32.totalorder %s21, 0
      %p42 = por %p40, %p41
      %p43 = scmp.ne.s32.totalorder %s29, %s30
      %p44 = scmp.eq.s32.totalorder %s22, 3
      %p45 = por %p43, %p44
      %p47 = scmp.ne.s32.totalorder %s30, %s46
      %p48 = scmp.eq.s32.totalorder %s22, 0
      %p49 = por %p47, %p48
      %s51 = sadd.s32 %s50, 1
      %p54 = scmp.eq.s32.totalorder %s16, 3
      %p55 = scmp.ne.s32.totalorder %s50, %s52
      %p56 = scmp.eq.s32.totalorder %s16, 0
      %p57 = por %p55, %p56
      %p58 = scmp.ne.s32.totalorder %s50, %s52
      %p59 = scmp.eq.s32.totalorder %s21, 3
      %p60 = por %p58, %p59
      %p61 = scmp.ne.s32.totalorder %s52, %s53
      %p62 = scmp.eq.s32.totalorder %s21, 0
      %p63 = por %p61, %p62
      %p64 = scmp.ne.s32.totalorder %s52, %s53
      %p65 = scmp.eq.s32.totalorder %s22, 3
      %p66 = por %p64, %p65
      %p68 = scmp.ne.s32.totalorder %s53, %s67
      %p69 = scmp.eq.s32.totalorder %s22, 0
      %p70 = por %p68, %p69
      %s71 = ssub.s32 %s16, %s23
      %p72 = scmp.eq.s32.totalorder %s71, 0
      %s74 = sadd.s32 %s73, 1
      %s75 = scalar_select %p72, %s73, %s74
      %p78 = pneg %p72
      %p79 = scmp.eq.s32.totalorder %s16, 3
      %p80 = por %p78, %p79
      %p81 = scmp.ne.s32.totalorder %s73, %s76
      %p82 = scmp.eq.s32.totalorder %s16, 0
      %p83 = por %p81, %p82
      %p84 = scmp.ne.s32.totalorder %s73, %s76
      %p85 = scmp.eq.s32.totalorder %s21, 3
      %p86 = por %p84, %p85
      %p87 = scmp.ne.s32.totalorder %s76, %s77
      %p88 = scmp.eq.s32.totalorder %s21, 0
      %p89 = por %p87, %p88
      %p90 = scmp.ne.s32.totalorder %s76, %s77
      %p91 = scmp.eq.s32.totalorder %s22, 3
      %p92 = por %p90, %p91
      %p94 = scmp.ne.s32.totalorder %s77, %s93
      %p95 = scmp.eq.s32.totalorder %s22, 0
      %p96 = por %p94, %p95
      %s97 = ssub.s32 %s16, %s23
      %p98 = scmp.eq.s32.totalorder %s97, 0
      %s100 = sadd.s32 %s99, 1
      %s101 = scalar_select %p98, %s99, %s100
      %p104 = pneg %p98
      %p105 = scmp.eq.s32.totalorder %s16, 3
      %p106 = por %p104, %p105
      %p107 = scmp.ne.s32.totalorder %s99, %s102
      %p108 = scmp.eq.s32.totalorder %s16, 0
      %p109 = por %p107, %p108
      %p110 = scmp.ne.s32.totalorder %s99, %s102
      %p111 = scmp.eq.s32.totalorder %s21, 3
      %p112 = por %p110, %p111
      %p113 = scmp.ne.s32.totalorder %s102, %s103
      %p114 = scmp.eq.s32.totalorder %s21, 0
      %p115 = por %p113, %p114
      %p116 = scmp.ne.s32.totalorder %s102, %s103
      %p117 = scmp.eq.s32.totalorder %s22, 3
      %p118 = por %p116, %p117
      %p120 = scmp.ne.s32.totalorder %s103, %s119
      %p121 = scmp.eq.s32.totalorder %s22, 0
      %p122 = por %p120, %p121
      %p123 = scmp.le.s32.totalorder 1, %s16
      %p124 = scmp.lt.s32.totalorder %s16, 5
      %p125 = pnand %p123, %p124
      %p126 = pneg %p125
      // Predicated region
      $region9: #{tpu_custom_call.1} parent=5 // pred_check
        _
      $region10: #{tpu_custom_call.1} parent=5 // pred_check_branch
        %128 = sbr.rel (%p125) target = $region12
      $region11: #{tpu_custom_call.1} parent=5 // pred_region
        %s129 = ssub.s32 %s16, 1
        // Predicated region
        $region13: #{tpu_custom_call.1} parent=11 // pred_check
          %p130 = pneg %p63
        $region14: #{tpu_custom_call.1} parent=11 // pred_check_branch
          %132 = sbr.rel (%p130) target = $region16
        $region15: #{tpu_custom_call.1} parent=11 // pred_region
          _
        $region16: #{tpu_custom_call.1} parent=11 // pred_fallthru
          _
      $region12: #{tpu_custom_call.1} parent=5 // pred_fallthru
        _
      %p133 = scmp.lt.s32.totalorder %s16, 4
      // Predicated region
      $region17: #{tpu_custom_call.1} parent=5 // pred_check
        %p134 = pneg %p133
      $region18: #{tpu_custom_call.1} parent=5 // pred_check_branch
        %136 = sbr.rel (%p134) target = $region20
      $region19: #{tpu_custom_call.1} parent=5 // pred_region
        // Predicated region
        $region21: #{tpu_custom_call.1} parent=19 // pred_check
          %p137 = pneg %p36
        $region22: #{tpu_custom_call.1} parent=19 // pred_check_branch
          %139 = sbr.rel (%p137) target = $region24
        $region23: #{tpu_custom_call.1} parent=19 // pred_region
          %p140 = scmp.lt.s32.totalorder %s16, 3
          %s141 = scalar_select %p140, %s16, 3
          %s142 = smul.addr %s141, 2
          %s143 = scalar_lea.vmem %s0, %s142
        $region24: #{tpu_custom_call.1} parent=19 // pred_fallthru
          _
      $region20: #{tpu_custom_call.1} parent=5 // pred_fallthru
        _
      %p144 = scmp.le.s32.totalorder 1, %s16
      %p145 = scmp.lt.s32.totalorder %s16, 5
      %p146 = pnand %p144, %p145
      %p147 = pneg %p146
      // Predicated region
      $region25: #{tpu_custom_call.1} parent=5 // pred_check
        _
      $region26: #{tpu_custom_call.1} parent=5 // pred_check_branch
        %149 = sbr.rel (%p146) target = $region28
      $region27: #{tpu_custom_call.1} parent=5 // pred_region
        %s150 = ssub.s32 %s16, 1
        %p151 = scmp.lt.s32.totalorder %s21, 3
        %s152 = scalar_select %p151, %s21, 3
        %s153 = smul.addr %s152, 2
        %s154 = scalar_lea.vmem %s0, %s153
        %p155 = pneg %p42
        %p156 = pneg %p39
        %p157 = pneg %p63
        %p158 = pneg %p60
        %p159 = pneg %p89
        %p160 = pneg %p86
        %s161 = sand.u32 %s76, 1
        %s162 = scalar_lea.sflag [#allocation3], %s161
        %s163 = sand.u32 %s76, 1
        %s164 = smul.addr %s163, 4
        %s165 = scalar_lea.vmem [#allocation2], %s164
        %p166 = pneg %p115
        %p167 = pneg %p112
        %s168 = sand.u32 %s102, 1
        %s169 = scalar_lea.sflag [#allocation5], %s168
        %s170 = sand.u32 %s102, 1
        %s171 = smul.addr %s170, 4
        %s172 = scalar_lea.vmem [#allocation4], %s171
        %p173 = scmp.lt.s32.totalorder %s21, 3
        %s174 = scalar_select %p173, %s21, 3
        %s175 = smul.addr %s174, 2
        %s176 = scalar_lea.vmem %s0, %s175
        %v177 = vld [vmem:[%s176] sm:$0x3]
        %179 = vset.pattern.permute.xlu0 0
        %180 = vperm.xlu0 %179, %v177
        %v181 = vpop.permute.xlu0 %180
        %vm183 = vcmask 1041408
        %v184 = vsel %vm183, %v181, 0.0
        %vm185 = vcmask 60416
        %186 = vst.msk [vmem:[%s165] sm:$0xf] %vm185, %v184
        %v187 = vld [vmem:[%s1] sm:$0xf]
        %vm188 = vcmp.gt.f32.partialorder %v187, 20.0
        %v189 = vmin.f32 %v187, 20.0
        %v190 = vmul.f32 %v189, 1.442695
        %v191 = vpow.pop %v190
        %v192 = vadd.f32 %v191, 1.0
        %v193 = vlog2.pop %v192
        %v194 = vmul.f32 %v193, 0.6931472
        %v195 = vmul.f32 -0.5, %v191
        %v196 = vadd.f32 %v195, 1.0
        %v197 = vmul.f32 %v196, %v191
        %v198 = vand.u32 2147483647, %v191
        %vm199 = vcmp.lt.f32.partialorder %v198, 0.0004427343
        %v200 = vsel %vm199, %v197, %v194
        %v201 = vsel %vm188, %v187, %v200
        %v202 = vadd.f32 %v201, 1e-06
        %v203 = vlaneseq
        %v204 = vand.u32 %v203, 127
        %vm205 = vcmp.lt.s32.totalorder %v204, 0
        %v206 = vsub.s32 0, %v204
        %v207 = vsel %vm205, %v206, %v204
        %v208 = vmul.u32.u64.compose %v207, 3817748708
        %v209 = vextract.low.u32 %v208
        %v210 = vextract.high.u32 %v208
        %v211 = vshrl.u32 %v210, 3
        %v212 = vmul.u32 %v211, 9
        %v213 = vsub.s32 %v207, %v212
        %v214 = vsub.s32 0, %v213
        %v215 = vsel %vm205, %v214, %v213
        %vm216 = vcmp.ne.s32.totalorder %v215, 0
        %vm217 = vcmp.lt.s32.totalorder %v215, 0
        %vm218 = vmand %vm217, %vm216
        %v219 = vadd.s32 %v215, 9
        %v220 = vsel %vm218, %v219, %v215
        %vm221 = vcmp.eq.s32.totalorder %v220, 0
        %v222 = vsel %vm221, 1, 0
        %v223 = vcvt.s32.f32 %v222
        %225 = vset.pattern.permute.xlu0 0
        %226 = vperm.xlu0 %225, %v202
        %v227 = vpop.permute.xlu0 %226
        %v229 = vmul.f32 %v227, %v223
        %vm230 = vcmask 519168
        %231 = vst.msk [vmem:[%s172] sm:$0xf] %vm230, %v229
        %s232 = sand.u32 %s76, 1
        %s233 = scalar_lea.sflag [#allocation3], %s232
        %s234 = sand.u32 %s76, 1
        %s235 = smul.addr %s234, 4
        %s236 = scalar_lea.vmem [#allocation2], %s235
        %s237 = sand.u32 %s102, 1
        %s238 = scalar_lea.sflag [#allocation5], %s237
        %s239 = sand.u32 %s102, 1
        %s240 = smul.addr %s239, 4
        %s241 = scalar_lea.vmem [#allocation4], %s240
        // Predicated region
        $region29: #{tpu_custom_call.1} parent=27 // pred_check
          %p242 = pneg %p86
        $region30: #{tpu_custom_call.1} parent=27 // pred_check_branch
          %244 = sbr.rel (%p242) target = $region32
        $region31: #{tpu_custom_call.1} parent=27 // pred_region
          %s246 = ssub.s32 64, 64
          %247 = vsyncadd %s233, %s246
          %s248 = smul.addr %s21, 64
          %s249 = scalar_lea.hbm %s2, %s248
          %s251 = sshll.u32 %s236, 4
          %s252 = int_to_ptr.vmem [resolvable:$true] %s251
          %254 = dma.vmem_to_hbm [thread:$0]  %s252, 64, %s249, %s233
        $region32: #{tpu_custom_call.1} parent=27 // pred_fallthru
          _
        // Predicated region
        $region33: #{tpu_custom_call.1} parent=27 // pred_check
          %p255 = pneg %p112
        $region34: #{tpu_custom_call.1} parent=27 // pred_check_branch
          %257 = sbr.rel (%p255) target = $region36
        $region35: #{tpu_custom_call.1} parent=27 // pred_region
          %s259 = ssub.s32 64, 64
          %260 = vsyncadd %s238, %s259
          %s261 = smul.addr %s21, 64
          %s262 = scalar_lea.hbm %s3, %s261
          %s264 = sshll.u32 %s241, 4
          %s265 = int_to_ptr.vmem [resolvable:$true] %s264
          %267 = dma.vmem_to_hbm [thread:$0]  %s265, 64, %s262, %s238
        $region36: #{tpu_custom_call.1} parent=27 // pred_fallthru
          _
      $region28: #{tpu_custom_call.1} parent=5 // pred_fallthru
        _
      %p268 = scmp.le.s32.totalorder 2, %s16
      // Predicated region
      $region37: #{tpu_custom_call.1} parent=5 // pred_check
        %p269 = pneg %p268
      $region38: #{tpu_custom_call.1} parent=5 // pred_check_branch
        %271 = sbr.rel (%p269) target = $region40
      $region39: #{tpu_custom_call.1} parent=5 // pred_region
        %s272 = ssub.s32 %s16, 2
        // Predicated region
        $region41: #{tpu_custom_call.1} parent=39 // pred_check
          %p273 = pneg %p92
        $region42: #{tpu_custom_call.1} parent=39 // pred_check_branch
          %275 = sbr.rel (%p273) target = $region44
        $region43: #{tpu_custom_call.1} parent=39 // pred_region
          %s276 = sand.u32 %s77, 1
          %s277 = scalar_lea.sflag [#allocation3], %s276
          %s278 = sand.u32 %s77, 1
          %s279 = smul.addr %s278, 4
          %s280 = scalar_lea.vmem [#allocation2], %s279
          %281 = dma.done %s277, 64
        $region44: #{tpu_custom_call.1} parent=39 // pred_fallthru
          _
        // Predicated region
        $region45: #{tpu_custom_call.1} parent=39 // pred_check
          %p282 = pneg %p118
        $region46: #{tpu_custom_call.1} parent=39 // pred_check_branch
          %284 = sbr.rel (%p282) target = $region48
        $region47: #{tpu_custom_call.1} parent=39 // pred_region
          %s285 = sand.u32 %s103, 1
          %s286 = scalar_lea.sflag [#allocation5], %s285
          %s287 = sand.u32 %s103, 1
          %s288 = smul.addr %s287, 4
          %s289 = scalar_lea.vmem [#allocation4], %s288
          %290 = dma.done %s286, 64
        $region48: #{tpu_custom_call.1} parent=39 // pred_fallthru
          _
      $region40: #{tpu_custom_call.1} parent=5 // pred_fallthru
        _
    $region6: #{tpu_custom_call.1} parent=1 // loop_footer
      %s20 = sadd.s32 1, %s16
    $region7: #{tpu_custom_call.1} parent=1 // loop_footer_branch
      %15 = sbr.rel target = $region3
    $region8: #{tpu_custom_call.1} parent=1 // loop_exit
      _
    %291 = vsyncpa [#allocation3], 1
    %s292 = scalar_lea.sflag [#allocation3], 1
    %293 = vsyncpa %s292, 1
    %294 = vsyncpa [#allocation5], 1
    %s295 = scalar_lea.sflag [#allocation5], 1
    %296 = vsyncpa %s295, 1

</llo_original>
